<compile_context>
chip_gen: v5e
topology: v5e:2x2
jax: 0.10.0
libtpu: 0.0.40
codegen_flags: <defaults>
</compile_context>

<pallas_src>
import functools

import jax
import jax.numpy as jnp
from jax.experimental import pallas as pl
from jax.experimental.pallas import tpu as pltpu


_LANE = 128
# Per-input-block VMEM budget (bytes).  The pipeline double-buffers inputs, so
# resident input footprint is ~2x this; with the (tr,128) f32 accumulator the
# total stays well under v5e's 16 MiB scoped default (and v7x's 32 MiB).
_BLOCK_BYTES = 4 * 1024 * 1024
_MAX_TR = 2048          # row-tile cap (sublane axis)
_MAX_TL = 1024          # reduction-tile cap (lane axis)
# Below this, kernel-launch + grid overhead dwarfs the work; use fused XLA mean.
_MIN_PALLAS_BYTES = 64 * 1024


def _round_up(x, m):
    return ((x + m - 1) // m) * m


# ----------------------------------------------------------------------------
# Pallas kernel: adaptive average pool to output size 1  == mean over last dim
# ----------------------------------------------------------------------------
def _avgpool_kernel(x_ref, o_ref, acc_ref, *, inv_l, length, tl, n_chunks,
                    ragged):
    """Row-wise mean over the last axis, accumulated across the L grid axis.

    acc_ref is a lane-wide (tr, 128) f32 accumulator: per step we only do VPU
    element-wise adds of 128-lane chunks; the single cross-lane reduction runs
    once per row tile in the finalize branch.
    """
    k = pl.program_id(1)
    last = pl.num_programs(1) - 1

    @pl.when(k == 0)
    def _init():
        acc_ref[...] = jnp.zeros_like(acc_ref)

    def accumulate(apply_mask):
        x = x_ref[...]
        if x.dtype != jnp.float32:          # f32 accumulation for bf16 inputs
            x = x.astype(jnp.float32)
        if apply_mask:
            # Zero the out-of-range columns of the (overhanging) last L-block.
            col = jax.lax.broadcasted_iota(jnp.int32, x.shape, 1) + k * tl
            x = jnp.where(col < length, x, 0.0)
        acc = acc_ref[...]
        for c in range(n_chunks):           # unrolled, lane-aligned VPU adds
            acc = acc + x[:, c * _LANE:(c + 1) * _LANE]
        acc_ref[...] = acc

    if ragged:
        # Only the last L-block needs the iota/select; gate it with pl.when so
        # steady-state steps stay pure load+add.
        @pl.when(k == last)
        def _masked():
            accumulate(apply_mask=True)

        @pl.when(k != last)
        def _unmasked():
            accumulate(apply_mask=False)
    else:
        accumulate(apply_mask=False)

    @pl.when(k == last)
    def _finalize():
        # Single cross-lane (XLU) reduce per row tile, then scale by the
        # hoisted Python-float 1/L (masked columns contributed 0 to the sum).
        total = jnp.sum(acc_ref[...], axis=-1, keepdims=True)
        o_ref[...] = (total * inv_l).astype(o_ref.dtype)


def _pick_tiles(rows, length, itemsize):
    """Choose (row_tile, length_tile) for the pooling kernel."""
    # Reduction (lane) tile: fixed large multiple of 128 (ragged tail handled
    # by the in-kernel mask, so no divisor constraint).
    tl = min(_MAX_TL, _round_up(length, _LANE))

    # Native sublane multiple per dtype: 8 (f32), 16 (bf16/f16), 32 (int8/fp8).
    sub = max(8, 32 // itemsize)

    # Row (sublane) tile: VMEM-budgeted multiple of `sub`, capped by row count.
    tr = max(sub, (_BLOCK_BYTES // (tl * itemsize)) // sub * sub)
    tr = min(tr, _MAX_TR, _round_up(rows, sub))
    # Keep >= ~4 row steps when possible so double-buffered DMA and megacore
    # ("parallel" rows axis, 2 TCs on v7x) have work to overlap.
    while tr > 128 and pl.cdiv(rows, tr) < 4:
        tr = max(sub, (tr // 2) // sub * sub)
    return tr, tl


def adaptive_avg_pool1d(x):
    """Pallas equivalent of nn.AdaptiveAvgPool1d(1) for NCL input."""
    N, C, L = x.shape
    rows = N * C
    x2 = x.reshape(rows, L)

    # Tiny inputs: fused XLA mean is strictly faster than a kernel launch.
    if rows * L * x.dtype.itemsize < _MIN_PALLAS_BYTES:
        pooled = jnp.mean(x2.astype(jnp.float32), axis=-1, keepdims=True)
        return pooled.astype(x.dtype).reshape(N, C, 1)

    tr, tl = _pick_tiles(rows, L, x.dtype.itemsize)
    grid = (pl.cdiv(rows, tr), pl.cdiv(L, tl))

    kernel = functools.partial(
        _avgpool_kernel,
        inv_l=1.0 / L,
        length=L,
        tl=tl,
        n_chunks=tl // _LANE,
        ragged=(L % tl) != 0,
    )

    out = pl.pallas_call(
        kernel,
        out_shape=jax.ShapeDtypeStruct((rows, 1), x.dtype),
        grid_spec=pltpu.PrefetchScalarGridSpec(
            num_scalar_prefetch=0,
            grid=grid,
            in_specs=[pl.BlockSpec((tr, tl), lambda i, k: (i, k))],
            out_specs=pl.BlockSpec((tr, 1), lambda i, k: (i, 0)),
            scratch_shapes=[pltpu.VMEM((tr, _LANE), jnp.float32)],
        ),
        compiler_params=pltpu.CompilerParams(
            dimension_semantics=("parallel", "arbitrary"),
        ),
    )(x2)
    # Overhanging row blocks write only in-bounds rows; no junk to strip beyond
    # the exact (rows, 1) output shape.
    return out.reshape(N, C, 1)


# ----------------------------------------------------------------------------
# Module wrapper mirroring XGBoost.forward semantics (tensor parts only)
# ----------------------------------------------------------------------------
class XGBoostPallas:
    def __init__(self, emb_tech: int, useTitle: bool):
        self.model_name = "XGBoost"
        self.emb_tech = emb_tech
        self.direction = "with_title" if useTitle else "no_title"
        self.model_direction = "phobert" if emb_tech == 1 else "phow2v"
        # nn.AdaptiveAvgPool1d(1) equivalent
        self.pool = adaptive_avg_pool1d

    def forward(self, x, y=None, train=True):
        # emb_tech == 2: flatten per-sample features (matches torch's
        # x.reshape(x.shape[0], -1)).
        if self.emb_tech == 2:
            x = x.reshape(x.shape[0], -1)
        # TODO(synk): xgb.train / xgb.Booster().predict (gradient-boosted trees
        # + model file I/O) have no Pallas equivalent; return the prepared
        # feature matrix instead.
        return x


if __name__ == "__main__":
    key = jax.random.PRNGKey(0)
    k1, k2, k3, k4, k5 = jax.random.split(key, 5)

    model = XGBoostPallas(emb_tech=2, useTitle=True)

    # --- Pallas hot path #1: lane/sublane-aligned shape (NCL) ---
    N, C, L = 4, 32, 256
    x = jax.random.normal(k1, (N, C, L), dtype=jnp.float32)
    pooled = jax.block_until_ready(model.pool(x))
    ref = jnp.mean(x, axis=-1, keepdims=True)
    assert pooled.shape == (N, C, 1)
    assert jnp.allclose(pooled, ref, atol=1e-5, rtol=1e-5)

    # --- Pallas hot path #2: ragged rows + ragged L (overhang + in-kernel mask) ---
    N2, C2, L2 = 5, 30, 200
    x2 = jax.random.normal(k2, (N2, C2, L2), dtype=jnp.float32)
    pooled2 = jax.block_until_ready(model.pool(x2))
    ref2 = jnp.mean(x2, axis=-1, keepdims=True)
    assert pooled2.shape == (N2, C2, 1)
    assert jnp.allclose(pooled2, ref2, atol=1e-5, rtol=1e-5)

    # --- Pallas hot path #3: multi-block reduction axis with masked tail ---
    N3, C3, L3 = 2, 48, 1200
    x3 = jax.random.normal(k3, (N3, C3, L3), dtype=jnp.float32)
    pooled3 = jax.block_until_ready(model.pool(x3))
    ref3 = jnp.mean(x3, axis=-1, keepdims=True)
    assert jnp.allclose(pooled3, ref3, atol=1e-5, rtol=1e-5)

    # --- Pallas hot path #4: bf16 input (f32 accumulation, 16-sublane tiling) ---
    N4, C4, L4 = 4, 64, 300
    x4 = jax.random.normal(k4, (N4, C4, L4), dtype=jnp.bfloat16)
    pooled4 = jax.block_until_ready(model.pool(x4))
    ref4 = jnp.mean(x4.astype(jnp.float32), axis=-1, keepdims=True).astype(jnp.bfloat16)
    assert jnp.allclose(pooled4.astype(jnp.float32), ref4.astype(jnp.float32),
                        atol=1e-2, rtol=1e-2)

    # --- tiny shape: routed through the fused-XLA fast path ---
    x5 = jax.random.normal(k5, (2, 8, 128), dtype=jnp.float32)
    pooled5 = jax.block_until_ready(model.pool(x5))
    assert jnp.allclose(pooled5, jnp.mean(x5, axis=-1, keepdims=True),
                        atol=1e-5, rtol=1e-5)

    # --- forward path used for emb_tech == 2 (feature flatten) ---
    feats = jax.block_until_ready(model.forward(x, train=False))
    assert feats.shape == (N, C * L)

    print("KERNEL_OK")
</pallas_src>

<mosaic_0001>
module attributes {stable_mosaic.version = 11 : i64} {
  func.func @_avgpool_kernel(%arg0: i32, %arg1: i32, %arg2: memref<128x256xf32, #tpu.memory_space<vmem>>, %arg3: memref<128x1xf32, #tpu.memory_space<vmem>>, %arg4: memref<128x128xf32, #tpu.memory_space<vmem>>) attributes {dimension_semantics = [#tpu.dimension_semantics<parallel>, #tpu.dimension_semantics<arbitrary>], iteration_bounds = array<i64: 1, 1>, scalar_prefetch = 0 : i64, scratch_operands = 1 : i64, tpu.core_type = #tpu.core_type<tc>, window_params = [{transform_indices = @transform_0, window_bounds = array<i64: 128, 256>}, {transform_indices = @transform_1, window_bounds = array<i64: 128, 1>}]} {
    %c0_i32 = arith.constant 0 : i32
    %0 = arith.cmpi eq, %arg1, %c0_i32 : i32
    %1 = arith.extui %0 : i1 to i32
    %c0_i32_0 = arith.constant 0 : i32
    %2 = arith.cmpi ne, %1, %c0_i32_0 : i32
    scf.if %2 {
      %cst = arith.constant 0.000000e+00 : f32
      %13 = vector.broadcast %cst : f32 to vector<128x128xf32>
      %c0_8 = arith.constant 0 : index
      %c0_9 = arith.constant 0 : index
      %14 = vector.load %arg4[%c0_8, %c0_9] : memref<128x128xf32, #tpu.memory_space<vmem>>, vector<128x128xf32>
      tpu.vector_store %arg4[%c0_8, %c0_9], %13 {strides = array<i32>} : memref<128x128xf32, #tpu.memory_space<vmem>>, vector<128x128xf32>,
    } else {
    }
    %c0 = arith.constant 0 : index
    %c0_1 = arith.constant 0 : index
    %3 = vector.load %arg2[%c0, %c0_1] : memref<128x256xf32, #tpu.memory_space<vmem>>, vector<128x256xf32>
    %c0_2 = arith.constant 0 : index
    %c0_3 = arith.constant 0 : index
    %4 = vector.load %arg4[%c0_2, %c0_3] : memref<128x128xf32, #tpu.memory_space<vmem>>, vector<128x128xf32>
    %5 = vector.extract_strided_slice %3 {offsets = [0, 0], sizes = [128, 128], strides = [1, 1]} : vector<128x256xf32> to vector<128x128xf32>
    %6 = arith.addf %4, %5 : vector<128x128xf32>
    %7 = vector.extract_strided_slice %3 {offsets = [0, 128], sizes = [128, 128], strides = [1, 1]} : vector<128x256xf32> to vector<128x128xf32>
    %8 = arith.addf %6, %7 : vector<128x128xf32>
    %c0_4 = arith.constant 0 : index
    %c0_5 = arith.constant 0 : index
    %9 = vector.load %arg4[%c0_4, %c0_5] : memref<128x128xf32, #tpu.memory_space<vmem>>, vector<128x128xf32>
    tpu.vector_store %arg4[%c0_4, %c0_5], %8 {strides = array<i32>} : memref<128x128xf32, #tpu.memory_space<vmem>>, vector<128x128xf32>,
    %c0_i32_6 = arith.constant 0 : i32
    %10 = arith.cmpi eq, %arg1, %c0_i32_6 : i32
    %11 = arith.extui %10 : i1 to i32
    %c0_i32_7 = arith.constant 0 : i32
    %12 = arith.cmpi ne, %11, %c0_i32_7 : i32
    scf.if %12 {
      %c0_8 = arith.constant 0 : index
      %c0_9 = arith.constant 0 : index
      %13 = vector.load %arg4[%c0_8, %c0_9] : memref<128x128xf32, #tpu.memory_space<vmem>>, vector<128x128xf32>
      %cst = arith.constant dense<0.000000e+00> : vector<128xf32>
      %14 = vector.multi_reduction <add>, %13, %cst [1] : vector<128x128xf32> to vector<128xf32>
      %15 = vector.shape_cast %14 : vector<128xf32> to vector<128x1xf32>
      %cst_10 = arith.constant 3.906250e-03 : f32
      %16 = vector.broadcast %cst_10 : f32 to vector<128x1xf32>
      %17 = arith.mulf %15, %16 : vector<128x1xf32>
      %c0_11 = arith.constant 0 : index
      %c0_12 = arith.constant 0 : index
      %18 = vector.load %arg3[%c0_11, %c0_12] : memref<128x1xf32, #tpu.memory_space<vmem>>, vector<128x1xf32>
      tpu.vector_store %arg3[%c0_11, %c0_12], %17 {strides = array<i32>} : memref<128x1xf32, #tpu.memory_space<vmem>>, vector<128x1xf32>,
    } else {
    }
    return
  }
  func.func @transform_0(%arg0: i32, %arg1: i32) -> (i32, i32) {
    %c0_i32 = arith.constant 0 : i32
    return %arg0, %arg1 : i32, i32
  }
  func.func @transform_1(%arg0: i32, %arg1: i32) -> (i32, i32) {
    %c0_i32 = arith.constant 0 : i32
    %c0_i32_0 = arith.constant 0 : i32
    return %arg0, %c0_i32 : i32, i32
  }
}

</mosaic_0001>

<llo_original>
// kernel: tpu_custom_call.1
$region0: #{tpu_custom_call.1}
  #allocation0 [shape = 'u32[]', space=smem, size = 0x4, offset = 0x4, fixed_abs, tag = 'smem constant byte address 0x4 - core index']
  #allocation1 [shape = 'u32[72,128]{1,0:T(1,128)}', space=vmem, size = 0x9000, scoped, tag = 'internal scratch']
  #allocation2 [shape = 'f32[128,128]{1,0:T(8,128)}', space=vmem, size = 0x10000, scoped, tag = 'scratch operand']
  %s0 = inlined_call_operand.hbm [shape: f32[128,256], index: 0, kind: input, shape index: {}]
  %s1 = inlined_call_operand.vmem [shape: f32[128,1], index: 1, kind: output, shape index: {}]
  %s2 = sld [smem:[#allocation0]]
  $region26: #{tpu_custom_call.1} parent=0
    _
  %s4 = ssub.s32 1, %s2
  %s5 = scalar_select 0, %s4, %s2
  $region1: #{tpu_custom_call.1} parent=0
    #allocation3 [shape = 'u8[131072]{0}', space=vmem, size = 0x20000, scoped, tag = 'input window, operand 0, single buffered']
    #allocation4 [shape = 's32[1]{0}', space=sflag, size = 0x4, scoped, tag = 'scoped memory for tpu_custom_call.1']
    %6 = vsyncpa [#allocation4], 0
    // Predicated region
    $region2: #{tpu_custom_call.1} parent=1 // pred_check
      _
    $region3: #{tpu_custom_call.1} parent=1 // pred_check_branch
      %8 = sbr.rel (0) target = $region5
    $region4: #{tpu_custom_call.1} parent=1 // pred_region
      %10 = vsyncadd [#allocation4], 0
      %s11 = sshll.u32 %s0, 4
      %s12 = int_to_ptr.hbm [resolvable:$true] %s11
      %s13 = sshll.u32 [#allocation3], 4
      %s14 = int_to_ptr.vmem [resolvable:$true] %s13
      %19 = dma.hbm_to_vmem [thread:$0]  %s12, 4096, %s14, [#allocation4], 256, 256, 16
    $region5: #{tpu_custom_call.1} parent=1 // pred_fallthru
      _
    // Predicated region
    $region6: #{tpu_custom_call.1} parent=1 // pred_check
      _
    $region7: #{tpu_custom_call.1} parent=1 // pred_check_branch
      %21 = sbr.rel (0) target = $region9
    $region8: #{tpu_custom_call.1} parent=1 // pred_region
      %23 = dma.done [#allocation4], 4096
    $region9: #{tpu_custom_call.1} parent=1 // pred_fallthru
      _
    %p24 = scmp.eq.s32.totalorder 0, 0
    // Predicated region
    $region10: #{tpu_custom_call.1} parent=1 // pred_check
      %p25 = pneg %p24
    $region11: #{tpu_custom_call.1} parent=1 // pred_check_branch
      %27 = sbr.rel (%p25) target = $region13
    $region12: #{tpu_custom_call.1} parent=1 // pred_region
      %28 = vst [vmem:[#allocation2] sm:$0xff] 0.0
      %29 = vst [vmem:[#allocation2 + $0x8] sm:$0xff] 0.0
      %30 = vst [vmem:[#allocation2 + $0x10] sm:$0xff] 0.0
      %31 = vst [vmem:[#allocation2 + $0x18] sm:$0xff] 0.0
      %32 = vst [vmem:[#allocation2 + $0x20] sm:$0xff] 0.0
      %33 = vst [vmem:[#allocation2 + $0x28] sm:$0xff] 0.0
      %34 = vst [vmem:[#allocation2 + $0x30] sm:$0xff] 0.0
      %35 = vst [vmem:[#allocation2 + $0x38] sm:$0xff] 0.0
      %36 = vst [vmem:[#allocation2 + $0x40] sm:$0xff] 0.0
      %37 = vst [vmem:[#allocation2 + $0x48] sm:$0xff] 0.0
      %38 = vst [vmem:[#allocation2 + $0x50] sm:$0xff] 0.0
      %39 = vst [vmem:[#allocation2 + $0x58] sm:$0xff] 0.0
      %40 = vst [vmem:[#allocation2 + $0x60] sm:$0xff] 0.0
      %41 = vst [vmem:[#allocation2 + $0x68] sm:$0xff] 0.0
      %42 = vst [vmem:[#allocation2 + $0x70] sm:$0xff] 0.0
      %43 = vst [vmem:[#allocation2 + $0x78] sm:$0xff] 0.0
    $region13: #{tpu_custom_call.1} parent=1 // pred_fallthru
      _
    %v44 = vld [vmem:[#allocation3] sm:$0xff]
    %v45 = vld [vmem:[#allocation3 + $0x8] sm:$0xff]
    %v46 = vld [vmem:[#allocation3 + $0x10] sm:$0xff]
    %v47 = vld [vmem:[#allocation3 + $0x18] sm:$0xff]
    %v48 = vld [vmem:[#allocation3 + $0x20] sm:$0xff]
    %v49 = vld [vmem:[#allocation3 + $0x28] sm:$0xff]
    %v50 = vld [vmem:[#allocation3 + $0x30] sm:$0xff]
    %v51 = vld [vmem:[#allocation3 + $0x38] sm:$0xff]
    %v52 = vld [vmem:[#allocation3 + $0x40] sm:$0xff]
    %v53 = vld [vmem:[#allocation3 + $0x48] sm:$0xff]
    %v54 = vld [vmem:[#allocation3 + $0x50] sm:$0xff]
    %v55 = vld [vmem:[#allocation3 + $0x58] sm:$0xff]
    %v56 = vld [vmem:[#allocation3 + $0x60] sm:$0xff]
    %v57 = vld [vmem:[#allocation3 + $0x68] sm:$0xff]
    %v58 = vld [vmem:[#allocation3 + $0x70] sm:$0xff]
    %v59 = vld [vmem:[#allocation3 + $0x78] sm:$0xff]
    %v60 = vld [vmem:[#allocation3 + $0x80] sm:$0xff]
    %v61 = vld [vmem:[#allocation3 + $0x88] sm:$0xff]
    %v62 = vld [vmem:[#allocation3 + $0x90] sm:$0xff]
    %v63 = vld [vmem:[#allocation3 + $0x98] sm:$0xff]
    %v64 = vld [vmem:[#allocation3 + $0xa0] sm:$0xff]
    %v65 = vld [vmem:[#allocation3 + $0xa8] sm:$0xff]
    %v66 = vld [vmem:[#allocation3 + $0xb0] sm:$0xff]
    %v67 = vld [vmem:[#allocation3 + $0xb8] sm:$0xff]
    %v68 = vld [vmem:[#allocation3 + $0xc0] sm:$0xff]
    %v69 = vld [vmem:[#allocation3 + $0xc8] sm:$0xff]
    %v70 = vld [vmem:[#allocation3 + $0xd0] sm:$0xff]
    %v71 = vld [vmem:[#allocation3 + $0xd8] sm:$0xff]
    %v72 = vld [vmem:[#allocation3 + $0xe0] sm:$0xff]
    %v73 = vld [vmem:[#allocation3 + $0xe8] sm:$0xff]
    %v74 = vld [vmem:[#allocation3 + $0xf0] sm:$0xff]
    %v75 = vld [vmem:[#allocation3 + $0xf8] sm:$0xff]
    %v76 = vld [vmem:[#allocation2] sm:$0xff]
    %v77 = vld [vmem:[#allocation2 + $0x8] sm:$0xff]
    %v78 = vld [vmem:[#allocation2 + $0x10] sm:$0xff]
    %v79 = vld [vmem:[#allocation2 + $0x18] sm:$0xff]
    %v80 = vld [vmem:[#allocation2 + $0x20] sm:$0xff]
    %v81 = vld [vmem:[#allocation2 + $0x28] sm:$0xff]
    %v82 = vld [vmem:[#allocation2 + $0x30] sm:$0xff]
    %v83 = vld [vmem:[#allocation2 + $0x38] sm:$0xff]
    %v84 = vld [vmem:[#allocation2 + $0x40] sm:$0xff]
    %v85 = vld [vmem:[#allocation2 + $0x48] sm:$0xff]
    %v86 = vld [vmem:[#allocation2 + $0x50] sm:$0xff]
    %v87 = vld [vmem:[#allocation2 + $0x58] sm:$0xff]
    %v88 = vld [vmem:[#allocation2 + $0x60] sm:$0xff]
    %v89 = vld [vmem:[#allocation2 + $0x68] sm:$0xff]
    %v90 = vld [vmem:[#allocation2 + $0x70] sm:$0xff]
    %v91 = vld [vmem:[#allocation2 + $0x78] sm:$0xff]
    %v92 = vadd.f32 %v76, %v44
    %v93 = vadd.f32 %v77, %v46
    %v94 = vadd.f32 %v78, %v48
    %v95 = vadd.f32 %v79, %v50
    %v96 = vadd.f32 %v80, %v52
    %v97 = vadd.f32 %v81, %v54
    %v98 = vadd.f32 %v82, %v56
    %v99 = vadd.f32 %v83, %v58
    %v100 = vadd.f32 %v84, %v60
    %v101 = vadd.f32 %v85, %v62
    %v102 = vadd.f32 %v86, %v64
    %v103 = vadd.f32 %v87, %v66
    %v104 = vadd.f32 %v88, %v68
    %v105 = vadd.f32 %v89, %v70
    %v106 = vadd.f32 %v90, %v72
    %v107 = vadd.f32 %v91, %v74
    %v108 = vadd.f32 %v92, %v45
    %v109 = vadd.f32 %v93, %v47
    %v110 = vadd.f32 %v94, %v49
    %v111 = vadd.f32 %v95, %v51
    %v112 = vadd.f32 %v96, %v53
    %v113 = vadd.f32 %v97, %v55
    %v114 = vadd.f32 %v98, %v57
    %v115 = vadd.f32 %v99, %v59
    %v116 = vadd.f32 %v100, %v61
    %v117 = vadd.f32 %v101, %v63
    %v118 = vadd.f32 %v102, %v65
    %v119 = vadd.f32 %v103, %v67
    %v120 = vadd.f32 %v104, %v69
    %v121 = vadd.f32 %v105, %v71
    %v122 = vadd.f32 %v106, %v73
    %v123 = vadd.f32 %v107, %v75
    %124 = vst [vmem:[#allocation2] sm:$0xff] %v108
    %125 = vst [vmem:[#allocation2 + $0x8] sm:$0xff] %v109
    %126 = vst [vmem:[#allocation2 + $0x10] sm:$0xff] %v110
    %127 = vst [vmem:[#allocation2 + $0x18] sm:$0xff] %v111
    %128 = vst [vmem:[#allocation2 + $0x20] sm:$0xff] %v112
    %129 = vst [vmem:[#allocation2 + $0x28] sm:$0xff] %v113
    %130 = vst [vmem:[#allocation2 + $0x30] sm:$0xff] %v114
    %131 = vst [vmem:[#allocation2 + $0x38] sm:$0xff] %v115
    %132 = vst [vmem:[#allocation2 + $0x40] sm:$0xff] %v116
    %133 = vst [vmem:[#allocation2 + $0x48] sm:$0xff] %v117
    %134 = vst [vmem:[#allocation2 + $0x50] sm:$0xff] %v118
    %135 = vst [vmem:[#allocation2 + $0x58] sm:$0xff] %v119
    %136 = vst [vmem:[#allocation2 + $0x60] sm:$0xff] %v120
    %137 = vst [vmem:[#allocation2 + $0x68] sm:$0xff] %v121
    %138 = vst [vmem:[#allocation2 + $0x70] sm:$0xff] %v122
    %139 = vst [vmem:[#allocation2 + $0x78] sm:$0xff] %v123
    // Predicated region
    $region14: #{tpu_custom_call.1} parent=1 // pred_check
      %p140 = pneg %p24
    $region15: #{tpu_custom_call.1} parent=1 // pred_check_branch
      %142 = sbr.rel (%p140) target = $region17
    $region16: #{tpu_custom_call.1} parent=1 // pred_region
      %v143 = vld [vmem:[#allocation2] sm:$0xff]
      %v144 = vld [vmem:[#allocation2 + $0x8] sm:$0xff]
      %v145 = vld [vmem:[#allocation2 + $0x10] sm:$0xff]
      %v146 = vld [vmem:[#allocation2 + $0x18] sm:$0xff]
      %v147 = vld [vmem:[#allocation2 + $0x20] sm:$0xff]
      %v148 = vld [vmem:[#allocation2 + $0x28] sm:$0xff]
      %v149 = vld [vmem:[#allocation2 + $0x30] sm:$0xff]
      %v150 = vld [vmem:[#allocation2 + $0x38] sm:$0xff]
      %v151 = vld [vmem:[#allocation2 + $0x40] sm:$0xff]
      %v152 = vld [vmem:[#allocation2 + $0x48] sm:$0xff]
      %v153 = vld [vmem:[#allocation2 + $0x50] sm:$0xff]
      %v154 = vld [vmem:[#allocation2 + $0x58] sm:$0xff]
      %v155 = vld [vmem:[#allocation2 + $0x60] sm:$0xff]
      %v156 = vld [vmem:[#allocation2 + $0x68] sm:$0xff]
      %v157 = vld [vmem:[#allocation2 + $0x70] sm:$0xff]
      %v158 = vld [vmem:[#allocation2 + $0x78] sm:$0xff]
      %159 = vadd.xlane.f32.xlu0 %v143
      %v160 = vpop.xlane.xlu0 %159
      %161 = vadd.xlane.f32.xlu0 %v144
      %v162 = vpop.xlane.xlu0 %161
      %163 = vadd.xlane.f32.xlu0 %v145
      %v164 = vpop.xlane.xlu0 %163
      %165 = vadd.xlane.f32.xlu0 %v146
      %v166 = vpop.xlane.xlu0 %165
      %167 = vadd.xlane.f32.xlu0 %v147
      %v168 = vpop.xlane.xlu0 %167
      %169 = vadd.xlane.f32.xlu0 %v148
      %v170 = vpop.xlane.xlu0 %169
      %171 = vadd.xlane.f32.xlu0 %v149
      %v172 = vpop.xlane.xlu0 %171
      %173 = vadd.xlane.f32.xlu0 %v150
      %v174 = vpop.xlane.xlu0 %173
      %175 = vadd.xlane.f32.xlu0 %v151
      %v176 = vpop.xlane.xlu0 %175
      %177 = vadd.xlane.f32.xlu0 %v152
      %v178 = vpop.xlane.xlu0 %177
      %179 = vadd.xlane.f32.xlu0 %v153
      %v180 = vpop.xlane.xlu0 %179
      %181 = vadd.xlane.f32.xlu0 %v154
      %v182 = vpop.xlane.xlu0 %181
      %183 = vadd.xlane.f32.xlu0 %v155
      %v184 = vpop.xlane.xlu0 %183
      %185 = vadd.xlane.f32.xlu0 %v156
      %v186 = vpop.xlane.xlu0 %185
      %187 = vadd.xlane.f32.xlu0 %v157
      %v188 = vpop.xlane.xlu0 %187
      %189 = vadd.xlane.f32.xlu0 %v158
      %v190 = vpop.xlane.xlu0 %189
      %v191 = vmul.f32 %v160, 0.00390625
      %v192 = vmul.f32 %v162, 0.00390625
      %v193 = vmul.f32 %v164, 0.00390625
      %v194 = vmul.f32 %v166, 0.00390625
      %v195 = vmul.f32 %v168, 0.00390625
      %v196 = vmul.f32 %v170, 0.00390625
      %v197 = vmul.f32 %v172, 0.00390625
      %v198 = vmul.f32 %v174, 0.00390625
      %v199 = vmul.f32 %v176, 0.00390625
      %v200 = vmul.f32 %v178, 0.00390625
      %v201 = vmul.f32 %v180, 0.00390625
      %v202 = vmul.f32 %v182, 0.00390625
      %v203 = vmul.f32 %v184, 0.00390625
      %v204 = vmul.f32 %v186, 0.00390625
      %v205 = vmul.f32 %v188, 0.00390625
      %v206 = vmul.f32 %v190, 0.00390625
      %vm207 = vcmask 7168
      %208 = vst.msk [vmem:[%s1] sm:$0xff] %vm207, %v191
      %209 = vst.msk [vmem:[%s1 + $0x8] sm:$0xff] %vm207, %v192
      %210 = vst.msk [vmem:[%s1 + $0x10] sm:$0xff] %vm207, %v193
      %211 = vst.msk [vmem:[%s1 + $0x18] sm:$0xff] %vm207, %v194
      %212 = vst.msk [vmem:[%s1 + $0x20] sm:$0xff] %vm207, %v195
      %213 = vst.msk [vmem:[%s1 + $0x28] sm:$0xff] %vm207, %v196
      %214 = vst.msk [vmem:[%s1 + $0x30] sm:$0xff] %vm207, %v197
      %215 = vst.msk [vmem:[%s1 + $0x38] sm:$0xff] %vm207, %v198
      %216 = vst.msk [vmem:[%s1 + $0x40] sm:$0xff] %vm207, %v199
      %217 = vst.msk [vmem:[%s1 + $0x48] sm:$0xff] %vm207, %v200
      %218 = vst.msk [vmem:[%s1 + $0x50] sm:$0xff] %vm207, %v201
      %219 = vst.msk [vmem:[%s1 + $0x58] sm:$0xff] %vm207, %v202
      %220 = vst.msk [vmem:[%s1 + $0x60] sm:$0xff] %vm207, %v203
      %221 = vst.msk [vmem:[%s1 + $0x68] sm:$0xff] %vm207, %v204
      %222 = vst.msk [vmem:[%s1 + $0x70] sm:$0xff] %vm207, %v205
      %223 = vst.msk [vmem:[%s1 + $0x78] sm:$0xff] %vm207, %v206
    $region17: #{tpu_custom_call.1} parent=1 // pred_fallthru
      _
    // Predicated region
    $region18: #{tpu_custom_call.1} parent=1 // pred_check
      _
    $region19: #{tpu_custom_call.1} parent=1 // pred_check_branch
      %225 = sbr.rel (0) target = $region21
    $region20: #{tpu_custom_call.1} parent=1 // pred_region
      _
    $region21: #{tpu_custom_call.1} parent=1 // pred_fallthru
      _
    // Predicated region
    $region22: #{tpu_custom_call.1} parent=1 // pred_check
      _
    $region23: #{tpu_custom_call.1} parent=1 // pred_check_branch
      %227 = sbr.rel (0) target = $region25
    $region24: #{tpu_custom_call.1} parent=1 // pred_region
      _
    $region25: #{tpu_custom_call.1} parent=1 // pred_fallthru
      _
    %228 = vsyncpa [#allocation4], 1

</llo_original>
